<compile_context>
chip_gen: v5e
topology: v5e:2x2
jax: 0.10.0
libtpu: 0.0.40
codegen_flags: <defaults>
</compile_context>

<pallas_src>
import jax
import jax.numpy as jnp
from jax.experimental import pallas as pl
from jax.experimental.pallas import tpu as pltpu


# ----------------------------------------------------------------------------
# helpers
# ----------------------------------------------------------------------------
def _largest_divisor_leq(n: int, cap: int) -> int:
    """Largest divisor of n that is <= cap (>= 1)."""
    cap = max(1, min(cap, n))
    best = 1
    f = 1
    while f * f <= n:
        if n % f == 0:
            for d in (f, n // f):
                if d <= cap and d > best:
                    best = d
        f += 1
    return best


# ----------------------------------------------------------------------------
# primary path: HBM->HBM DMA copy, CLS strip from a tiny VMEM scratch
# ----------------------------------------------------------------------------
def _make_dma_kernel(tb: int, seq: int, d: int):
    def kernel(cls_ref, src_hbm, out_hbm, cls_buf, sems):
        # cls_ref : (1, 1, d)      VMEM (auto-copied, same block every step)
        # src_hbm : (B, seq, d)    HBM  (pl.ANY)
        # out_hbm : (B, seq+1, d)  HBM  (pl.ANY)
        # cls_buf : (tb, 1, d)     VMEM scratch, filled once at step 0
        # sems    : (2, 2) DMA semaphores  [stream(big/small), slot]
        i = pl.program_id(0)
        n = pl.num_programs(0)
        slot = i % 2

        @pl.when(i == 0)
        def _fill_cls():
            cls_buf[...] = jnp.broadcast_to(cls_ref[...], (tb, 1, d))

        def chunk_copies(step, sl):
            row0 = step * tb
            big = pltpu.make_async_copy(
                src_hbm.at[pl.ds(row0, tb), :, :],
                out_hbm.at[pl.ds(row0, tb), pl.ds(1, seq), :],
                sems.at[0, sl],
            )
            small = pltpu.make_async_copy(
                cls_buf,
                out_hbm.at[pl.ds(row0, tb), pl.ds(0, 1), :],
                sems.at[1, sl],
            )
            return big, small

        # Issue this step's DMAs first so the engines always have queued work,
        # then retire the previous step's (at most one chunk-pair outstanding).
        big, small = chunk_copies(i, slot)
        big.start()
        small.start()

        @pl.when(i > 0)
        def _wait_prev():
            pbig, psmall = chunk_copies(i - 1, 1 - slot)
            pbig.wait()
            psmall.wait()

        @pl.when(i == n - 1)
        def _wait_last():
            lbig, lsmall = chunk_copies(i, slot)
            lbig.wait()
            lsmall.wait()

    return kernel


def _cls_preprocess_dma(src: jax.Array, cls_token: jax.Array,
                        block_rows: int | None = None) -> jax.Array:
    B, S, D = src.shape
    dtype = src.dtype
    item = jnp.dtype(dtype).itemsize

    # Chunk sizing: ~8 MiB of src per step (amortizes per-step overhead on all
    # generations), CLS strip capped at ~2 MiB of VMEM (counting (1, D) tile
    # padding).  The bulk stream never touches VMEM, so S*D can be arbitrary.
    SRC_TARGET = 8 * 1024 * 1024
    CLS_VMEM_CAP = 2 * 1024 * 1024
    padded_cls_row = 8 * (-(-D // 128) * 128) * item
    cap_tgt = max(1, SRC_TARGET // max(1, S * D * item))
    cap_cls = max(1, CLS_VMEM_CAP // padded_cls_row)
    desired = block_rows if block_rows else min(cap_tgt, cap_cls)
    tb = _largest_divisor_leq(B, desired)          # tb | B: no edge blocks
    n_steps = B // tb

    kernel = _make_dma_kernel(tb, S, D)
    return pl.pallas_call(
        kernel,
        out_shape=jax.ShapeDtypeStruct((B, S + 1, D), dtype),
        grid_spec=pltpu.PrefetchScalarGridSpec(
            num_scalar_prefetch=0,
            grid=(n_steps,),
            in_specs=[
                pl.BlockSpec((1, 1, D), lambda i: (0, 0, 0)),   # cls -> VMEM
                pl.BlockSpec(memory_space=pl.ANY),              # src stays in HBM
            ],
            out_specs=pl.BlockSpec(memory_space=pl.ANY),        # out written via DMA
            scratch_shapes=[
                pltpu.VMEM((tb, 1, D), dtype),                  # broadcast CLS strip
                pltpu.SemaphoreType.DMA((2, 2)),                # [stream, slot]
            ],
        ),
        compiler_params=pltpu.CompilerParams(
            # Cross-step semaphore hand-off => keep the grid serial on one core;
            # a single issuing core saturates HBM for a DMA-only copy.
            dimension_semantics=("arbitrary",),
        ),
    )(cls_token, src)


# ----------------------------------------------------------------------------
# fallback path: lane-dense VMEM copy (used only if the DMA path is rejected)
# ----------------------------------------------------------------------------
def _vmem_kernel(cls_ref, src_ref, out_ref):
    # cls_ref: (1, D); src_ref: (tb, S*D); out_ref: (tb, (S+1)*D)
    tb = out_ref.shape[0]
    d = cls_ref.shape[1]
    out_ref[:, :d] = jnp.broadcast_to(cls_ref[...], (tb, d))
    out_ref[:, d:] = src_ref[...]


def _cls_preprocess_vmem(src: jax.Array, cls_token: jax.Array,
                         block_rows: int | None = None) -> jax.Array:
    B, S, D = src.shape
    dtype = src.dtype
    item = jnp.dtype(dtype).itemsize

    src2d = src.reshape(B, S * D)          # free, row-major
    cls2d = cls_token.reshape(1, D)

    row_bytes = S * D * item
    target = 4 * 1024 * 1024
    desired = block_rows if block_rows else max(1, target // max(1, row_bytes))
    tb = _largest_divisor_leq(B, desired)
    n_steps = B // tb

    # TODO(synk): for S*D rows larger than ~16 MiB this fallback would also
    # need a feature-axis tile; the primary DMA path has no such limit.
    src_blk = tb * S * D * item
    out_blk = tb * (S + 1) * D * item
    need = 2 * (src_blk + out_blk) + 4 * 8 * 128 * item
    vmem_limit = int(min(max(need + (2 << 20), 32 << 20), 64 << 20))

    out2d = pl.pallas_call(
        _vmem_kernel,
        out_shape=jax.ShapeDtypeStruct((B, (S + 1) * D), dtype),
        grid_spec=pltpu.PrefetchScalarGridSpec(
            num_scalar_prefetch=0,
            grid=(n_steps,),
            in_specs=[
                pl.BlockSpec((1, D), lambda i: (0, 0)),
                pl.BlockSpec((tb, S * D), lambda i: (i, 0)),
            ],
            out_specs=pl.BlockSpec((tb, (S + 1) * D), lambda i: (i, 0)),
        ),
        compiler_params=pltpu.CompilerParams(
            dimension_semantics=("parallel",),
            vmem_limit_bytes=vmem_limit,
        ),
    )(cls2d, src2d)
    return out2d.reshape(B, S + 1, D)


# ----------------------------------------------------------------------------
# dispatch: probe the HBM->HBM DMA path once, fall back if unsupported
# ----------------------------------------------------------------------------
_DMA_PATH_OK = None


def _dma_path_supported() -> bool:
    global _DMA_PATH_OK
    if _DMA_PATH_OK is None:
        try:
            b, s, d = 4, 3, 128
            cls_p = jnp.arange(d, dtype=jnp.float32).reshape(1, 1, d)
            src_p = jnp.arange(b * s * d, dtype=jnp.float32).reshape(b, s, d)
            got = jax.block_until_ready(
                _cls_preprocess_dma(src_p, cls_p, block_rows=2))
            ref = jnp.concatenate(
                [jnp.broadcast_to(cls_p, (b, 1, d)), src_p], axis=1)
            _DMA_PATH_OK = bool(jnp.allclose(got, ref))
        except Exception:
            _DMA_PATH_OK = False
    return _DMA_PATH_OK


def cls_preprocess(src: jax.Array, cls_token: jax.Array,
                   block_rows: int | None = None) -> jax.Array:
    """src: (B, S, D); cls_token: (1, 1, D) -> (B, S+1, D)."""
    B, S, D = src.shape
    if cls_token.shape != (1, 1, D):
        raise ValueError(f"cls_token must be (1, 1, {D}), got {cls_token.shape}")
    if cls_token.dtype != src.dtype:
        # torch.cat would raise on a dtype mismatch; don't silently cast.
        raise ValueError("cls_token dtype must match src dtype")
    if S == 0:
        return jnp.broadcast_to(cls_token, (B, 1, D))
    if _dma_path_supported():
        return _cls_preprocess_dma(src, cls_token, block_rows=block_rows)
    return _cls_preprocess_vmem(src, cls_token, block_rows=block_rows)


# ----------------------------------------------------------------------------
if __name__ == "__main__":
    # Small deterministic example: batch=2, seq=8, embed_dim=32.
    B, S, D = 2, 8, 32
    key = jax.random.PRNGKey(0)
    k_cls, k_src = jax.random.split(key)

    cls_token = jax.random.normal(k_cls, (1, 1, D), dtype=jnp.float32)
    src = jax.random.normal(k_src, (B, S, D), dtype=jnp.float32)

    out = jax.block_until_ready(cls_preprocess(src, cls_token))
    ref = jnp.concatenate([jnp.broadcast_to(cls_token, (B, 1, D)), src], axis=1)
    assert out.shape == (B, S + 1, D)
    assert jnp.allclose(out, ref), "mismatch vs reference"

    # Also exercise the multi-step, double-buffered path (tb=2 -> 3 grid steps,
    # D not a multiple of 128).
    B2, S2, D2 = 6, 5, 48
    k2, k3 = jax.random.split(k_src)
    cls2 = jax.random.normal(k2, (1, 1, D2), dtype=jnp.float32)
    src2 = jax.random.normal(k3, (B2, S2, D2), dtype=jnp.float32)
    out2 = jax.block_until_ready(cls_preprocess(src2, cls2, block_rows=2))
    ref2 = jnp.concatenate([jnp.broadcast_to(cls2, (B2, 1, D2)), src2], axis=1)
    assert jnp.allclose(out2, ref2), "mismatch vs reference (multi-step)"

    print("KERNEL_OK")
</pallas_src>

<mosaic_0001>
module attributes {stable_mosaic.version = 11 : i64} {
  func.func @kernel(%arg0: i32, %arg1: memref<1x1x128xf32, #tpu.memory_space<vmem>>, %arg2: memref<4x3x128xf32, #tpu.memory_space<any>>, %arg3: memref<4x4x128xf32, #tpu.memory_space<any>>, %arg4: memref<2x1x128xf32, #tpu.memory_space<vmem>>, %arg5: memref<2x2x!tpu.dma_semaphore, #tpu.memory_space<semaphore_mem>>) attributes {dimension_semantics = [#tpu.dimension_semantics<arbitrary>], iteration_bounds = array<i64: 2>, scalar_prefetch = 0 : i64, scratch_operands = 2 : i64, tpu.core_type = #tpu.core_type<tc>, window_params = [{pipeline_mode = #tpu.pipeline_mode<synchronous>, transform_indices = @transform_0, window_bounds = array<i64: 1, 1, 128>}, {}, {}]} {
    %c2_i32 = arith.constant 2 : i32
    %c0_i32 = arith.constant 0 : i32
    %0 = arith.cmpi eq, %c2_i32, %c0_i32 : i32
    %c1_i32 = arith.constant 1 : i32
    %1 = arith.select %0, %c1_i32, %c2_i32 : i32
    %2 = arith.remsi %arg0, %1 : i32
    %c0_i32_0 = arith.constant 0 : i32
    %3 = arith.cmpi ne, %2, %c0_i32_0 : i32
    %c0_i32_1 = arith.constant 0 : i32
    %4 = arith.cmpi slt, %2, %c0_i32_1 : i32
    %c0_i32_2 = arith.constant 0 : i32
    %5 = arith.cmpi slt, %1, %c0_i32_2 : i32
    %6 = arith.xori %4, %5 : i1
    %7 = arith.andi %6, %3 : i1
    %8 = arith.addi %2, %1 : i32
    %9 = arith.select %7, %8, %2 : i32
    %c0_i32_3 = arith.constant 0 : i32
    %10 = arith.cmpi eq, %arg0, %c0_i32_3 : i32
    %11 = arith.extui %10 : i1 to i32
    %c0_i32_4 = arith.constant 0 : i32
    %12 = arith.cmpi ne, %11, %c0_i32_4 : i32
    scf.if %12 {
      %c0 = arith.constant 0 : index
      %c0_18 = arith.constant 0 : index
      %c0_19 = arith.constant 0 : index
      %27 = vector.load %arg1[%c0, %c0_18, %c0_19] : memref<1x1x128xf32, #tpu.memory_space<vmem>>, vector<1x1x128xf32>
      %28 = vector.shape_cast %27 : vector<1x1x128xf32> to vector<1x1x128xf32>
      %29 = vector.broadcast %28 : vector<1x1x128xf32> to vector<2x1x128xf32>
      %c0_20 = arith.constant 0 : index
      %c0_21 = arith.constant 0 : index
      %c0_22 = arith.constant 0 : index
      %30 = vector.load %arg4[%c0_20, %c0_21, %c0_22] : memref<2x1x128xf32, #tpu.memory_space<vmem>>, vector<2x1x128xf32>
      tpu.vector_store %arg4[%c0_20, %c0_21, %c0_22], %29 {strides = array<i32>} : memref<2x1x128xf32, #tpu.memory_space<vmem>>, vector<2x1x128xf32>,
    } else {
    }
    %c2_i32_5 = arith.constant 2 : i32
    %13 = arith.muli %arg0, %c2_i32_5 : i32
    %c0_i32_6 = arith.constant 0 : i32
    %c0_i32_7 = arith.constant 0 : i32
    %c0_i32_8 = arith.constant 0 : i32
    %14 = tpu.memref_slice %arg2[%13, %c0_i32_7, %c0_i32_8] : memref<4x3x128xf32, #tpu.memory_space<any>> -> memref<2x3x128xf32, #tpu.memory_space<any>>
    %c1_i32_9 = arith.constant 1 : i32
    %c0_i32_10 = arith.constant 0 : i32
    %15 = tpu.memref_slice %arg3[%13, %c1_i32_9, %c0_i32_10] : memref<4x4x128xf32, #tpu.memory_space<any>> -> memref<2x3x128xf32, #tpu.memory_space<any>>
    %16 = tpu.memref_slice %arg5[%c0_i32_6, %9] : memref<2x2x!tpu.dma_semaphore, #tpu.memory_space<semaphore_mem>> -> memref<1x1x!tpu.dma_semaphore, #tpu.memory_space<semaphore_mem>>
    %17 = tpu.memref_squeeze %16 : memref<1x1x!tpu.dma_semaphore, #tpu.memory_space<semaphore_mem>> -> memref<!tpu.dma_semaphore, #tpu.memory_space<semaphore_mem>>
    tpu.enqueue_dma source(%14 : memref<2x3x128xf32, #tpu.memory_space<any>>) target(%15 : memref<2x3x128xf32, #tpu.memory_space<any>>) target_semaphore(%17 : memref<!tpu.dma_semaphore, #tpu.memory_space<semaphore_mem>>)
    %c1_i32_11 = arith.constant 1 : i32
    %c0_i32_12 = arith.constant 0 : i32
    %c0_i32_13 = arith.constant 0 : i32
    %18 = tpu.memref_slice %arg3[%13, %c0_i32_12, %c0_i32_13] : memref<4x4x128xf32, #tpu.memory_space<any>> -> memref<2x1x128xf32, #tpu.memory_space<any>>
    %19 = tpu.memref_slice %arg5[%c1_i32_11, %9] : memref<2x2x!tpu.dma_semaphore, #tpu.memory_space<semaphore_mem>> -> memref<1x1x!tpu.dma_semaphore, #tpu.memory_space<semaphore_mem>>
    %20 = tpu.memref_squeeze %19 : memref<1x1x!tpu.dma_semaphore, #tpu.memory_space<semaphore_mem>> -> memref<!tpu.dma_semaphore, #tpu.memory_space<semaphore_mem>>
    tpu.enqueue_dma source(%arg4 : memref<2x1x128xf32, #tpu.memory_space<vmem>>) target(%18 : memref<2x1x128xf32, #tpu.memory_space<any>>) target_semaphore(%20 : memref<!tpu.dma_semaphore, #tpu.memory_space<semaphore_mem>>)
    %c0_i32_14 = arith.constant 0 : i32
    %21 = arith.cmpi sgt, %arg0, %c0_i32_14 : i32
    %22 = arith.extui %21 : i1 to i32
    %c0_i32_15 = arith.constant 0 : i32
    %23 = arith.cmpi ne, %22, %c0_i32_15 : i32
    scf.if %23 {
      %c1_i32_18 = arith.constant 1 : i32
      %27 = arith.subi %arg0, %c1_i32_18 : i32
      %c1_i32_19 = arith.constant 1 : i32
      %28 = arith.subi %c1_i32_19, %9 : i32
      %c2_i32_20 = arith.constant 2 : i32
      %29 = arith.muli %27, %c2_i32_20 : i32
      %c0_i32_21 = arith.constant 0 : i32
      %c0_i32_22 = arith.constant 0 : i32
      %c0_i32_23 = arith.constant 0 : i32
      %30 = tpu.memref_slice %arg2[%29, %c0_i32_22, %c0_i32_23] : memref<4x3x128xf32, #tpu.memory_space<any>> -> memref<2x3x128xf32, #tpu.memory_space<any>>
      %c1_i32_24 = arith.constant 1 : i32
      %c0_i32_25 = arith.constant 0 : i32
      %31 = tpu.memref_slice %arg3[%29, %c1_i32_24, %c0_i32_25] : memref<4x4x128xf32, #tpu.memory_space<any>> -> memref<2x3x128xf32, #tpu.memory_space<any>>
      %32 = tpu.memref_slice %arg5[%c0_i32_21, %28] : memref<2x2x!tpu.dma_semaphore, #tpu.memory_space<semaphore_mem>> -> memref<1x1x!tpu.dma_semaphore, #tpu.memory_space<semaphore_mem>>
      %33 = tpu.memref_squeeze %32 : memref<1x1x!tpu.dma_semaphore, #tpu.memory_space<semaphore_mem>> -> memref<!tpu.dma_semaphore, #tpu.memory_space<semaphore_mem>>
      tpu.wait_dma2 semaphore(%33 : memref<!tpu.dma_semaphore, #tpu.memory_space<semaphore_mem>>) src(%30 : memref<2x3x128xf32, #tpu.memory_space<any>>) dst(%31 : memref<2x3x128xf32, #tpu.memory_space<any>>)
      %c1_i32_26 = arith.constant 1 : i32
      %c0_i32_27 = arith.constant 0 : i32
      %c0_i32_28 = arith.constant 0 : i32
      %34 = tpu.memref_slice %arg3[%29, %c0_i32_27, %c0_i32_28] : memref<4x4x128xf32, #tpu.memory_space<any>> -> memref<2x1x128xf32, #tpu.memory_space<any>>
      %35 = tpu.memref_slice %arg5[%c1_i32_26, %28] : memref<2x2x!tpu.dma_semaphore, #tpu.memory_space<semaphore_mem>> -> memref<1x1x!tpu.dma_semaphore, #tpu.memory_space<semaphore_mem>>
      %36 = tpu.memref_squeeze %35 : memref<1x1x!tpu.dma_semaphore, #tpu.memory_space<semaphore_mem>> -> memref<!tpu.dma_semaphore, #tpu.memory_space<semaphore_mem>>
      tpu.wait_dma2 semaphore(%36 : memref<!tpu.dma_semaphore, #tpu.memory_space<semaphore_mem>>) src(%arg4 : memref<2x1x128xf32, #tpu.memory_space<vmem>>) dst(%34 : memref<2x1x128xf32, #tpu.memory_space<any>>)
    } else {
    }
    %c1_i32_16 = arith.constant 1 : i32
    %24 = arith.cmpi eq, %arg0, %c1_i32_16 : i32
    %25 = arith.extui %24 : i1 to i32
    %c0_i32_17 = arith.constant 0 : i32
    %26 = arith.cmpi ne, %25, %c0_i32_17 : i32
    scf.if %26 {
      %c2_i32_18 = arith.constant 2 : i32
      %27 = arith.muli %arg0, %c2_i32_18 : i32
      %c0_i32_19 = arith.constant 0 : i32
      %c0_i32_20 = arith.constant 0 : i32
      %c0_i32_21 = arith.constant 0 : i32
      %28 = tpu.memref_slice %arg2[%27, %c0_i32_20, %c0_i32_21] : memref<4x3x128xf32, #tpu.memory_space<any>> -> memref<2x3x128xf32, #tpu.memory_space<any>>
      %c1_i32_22 = arith.constant 1 : i32
      %c0_i32_23 = arith.constant 0 : i32
      %29 = tpu.memref_slice %arg3[%27, %c1_i32_22, %c0_i32_23] : memref<4x4x128xf32, #tpu.memory_space<any>> -> memref<2x3x128xf32, #tpu.memory_space<any>>
      %30 = tpu.memref_slice %arg5[%c0_i32_19, %9] : memref<2x2x!tpu.dma_semaphore, #tpu.memory_space<semaphore_mem>> -> memref<1x1x!tpu.dma_semaphore, #tpu.memory_space<semaphore_mem>>
      %31 = tpu.memref_squeeze %30 : memref<1x1x!tpu.dma_semaphore, #tpu.memory_space<semaphore_mem>> -> memref<!tpu.dma_semaphore, #tpu.memory_space<semaphore_mem>>
      tpu.wait_dma2 semaphore(%31 : memref<!tpu.dma_semaphore, #tpu.memory_space<semaphore_mem>>) src(%28 : memref<2x3x128xf32, #tpu.memory_space<any>>) dst(%29 : memref<2x3x128xf32, #tpu.memory_space<any>>)
      %c1_i32_24 = arith.constant 1 : i32
      %c0_i32_25 = arith.constant 0 : i32
      %c0_i32_26 = arith.constant 0 : i32
      %32 = tpu.memref_slice %arg3[%27, %c0_i32_25, %c0_i32_26] : memref<4x4x128xf32, #tpu.memory_space<any>> -> memref<2x1x128xf32, #tpu.memory_space<any>>
      %33 = tpu.memref_slice %arg5[%c1_i32_24, %9] : memref<2x2x!tpu.dma_semaphore, #tpu.memory_space<semaphore_mem>> -> memref<1x1x!tpu.dma_semaphore, #tpu.memory_space<semaphore_mem>>
      %34 = tpu.memref_squeeze %33 : memref<1x1x!tpu.dma_semaphore, #tpu.memory_space<semaphore_mem>> -> memref<!tpu.dma_semaphore, #tpu.memory_space<semaphore_mem>>
      tpu.wait_dma2 semaphore(%34 : memref<!tpu.dma_semaphore, #tpu.memory_space<semaphore_mem>>) src(%arg4 : memref<2x1x128xf32, #tpu.memory_space<vmem>>) dst(%32 : memref<2x1x128xf32, #tpu.memory_space<any>>)
    } else {
    }
    return
  }
  func.func @transform_0(%arg0: i32) -> (i32, i32, i32) {
    %c0_i32 = arith.constant 0 : i32
    %c0_i32_0 = arith.constant 0 : i32
    %c0_i32_1 = arith.constant 0 : i32
    %c0_i32_2 = arith.constant 0 : i32
    return %c0_i32, %c0_i32_0, %c0_i32_1 : i32, i32, i32
  }
}

module attributes {stable_mosaic.version = 11 : i64} {
  func.func @_vmem_kernel(%arg0: i32, %arg1: memref<1x32xf32, #tpu.memory_space<vmem>>, %arg2: memref<2x256xf32, #tpu.memory_space<vmem>>, %arg3: memref<2x288xf32, #tpu.memory_space<vmem>>) attributes {dimension_semantics = [#tpu.dimension_semantics<parallel>], iteration_bounds = array<i64: 1>, scalar_prefetch = 0 : i64, scratch_operands = 0 : i64, tpu.core_type = #tpu.core_type<tc>, window_params = [{pipeline_mode = #tpu.pipeline_mode<synchronous>, transform_indices = @transform_0, window_bounds = array<i64: 1, 32>}, {transform_indices = @transform_1, window_bounds = array<i64: 2, 256>}, {transform_indices = @transform_2, window_bounds = array<i64: 2, 288>}]} {
    %c0 = arith.constant 0 : index
    %c0_0 = arith.constant 0 : index
    %0 = vector.load %arg1[%c0, %c0_0] : memref<1x32xf32, #tpu.memory_space<vmem>>, vector<1x32xf32>
    %1 = vector.shape_cast %0 : vector<1x32xf32> to vector<1x32xf32>
    %2 = vector.broadcast %1 : vector<1x32xf32> to vector<2x32xf32>
    %c0_1 = arith.constant 0 : index
    %c0_2 = arith.constant 0 : index
    %3 = vector.load %arg3[%c0_1, %c0_2] : memref<2x288xf32, #tpu.memory_space<vmem>>, vector<2x32xf32>
    tpu.vector_store %arg3[%c0_1, %c0_2], %2 {strides = array<i32>} : memref<2x288xf32, #tpu.memory_space<vmem>>, vector<2x32xf32>,
    %c0_3 = arith.constant 0 : index
    %c0_4 = arith.constant 0 : index
    %4 = vector.load %arg2[%c0_3, %c0_4] : memref<2x256xf32, #tpu.memory_space<vmem>>, vector<2x256xf32>
    %c0_5 = arith.constant 0 : index
    %c32 = arith.constant 32 : index
    %5 = vector.load %arg3[%c0_5, %c32] : memref<2x288xf32, #tpu.memory_space<vmem>>, vector<2x256xf32>
    tpu.vector_store %arg3[%c0_5, %c32], %4 {strides = array<i32>} : memref<2x288xf32, #tpu.memory_space<vmem>>, vector<2x256xf32>,
    return
  }
  func.func @transform_0(%arg0: i32) -> (i32, i32) {
    %c0_i32 = arith.constant 0 : i32
    %c0_i32_0 = arith.constant 0 : i32
    %c0_i32_1 = arith.constant 0 : i32
    return %c0_i32, %c0_i32_0 : i32, i32
  }
  func.func @transform_1(%arg0: i32) -> (i32, i32) {
    %c0_i32 = arith.constant 0 : i32
    %c0_i32_0 = arith.constant 0 : i32
    return %arg0, %c0_i32 : i32, i32
  }
  func.func @transform_2(%arg0: i32) -> (i32, i32) {
    %c0_i32 = arith.constant 0 : i32
    %c0_i32_0 = arith.constant 0 : i32
    return %arg0, %c0_i32 : i32, i32
  }
}

</mosaic_0001>

<llo_original>
// kernel: tpu_custom_call.1
$region0: #{tpu_custom_call.1}
  #allocation0 [shape = 'u32[]', space=smem, size = 0x4, offset = 0x4, fixed_abs, tag = 'smem constant byte address 0x4 - core index']
  #allocation1 [shape = 'u32[72,128]{1,0:T(1,128)}', space=vmem, size = 0x9000, scoped, tag = 'internal scratch']
  #allocation2 [shape = 'f32[2,1,128]{2,1,0:T(1,128)}', space=vmem, size = 0x400, scoped, tag = 'scratch operand']
  #allocation3 [shape = 's32[4]{0}', space=sflag, size = 0x10, scoped, tag = 'scratch operand']
  #allocation4 [shape = 's32[]', space=sflag, size = 0x4, offset = 0, fixed_abs, tag = 'sflag constant byte address 0x0 - dummy sync flag']
  #allocation5 [shape = 's32[]', space=sflag, size = 0x4, offset = 0, fixed_abs, tag = 'sflag constant byte address 0x0 - dummy sync flag']
  %s0 = inlined_call_operand.vmem [shape: f32[1,1,128], index: 0, kind: input, shape index: {}]
  %s1 = inlined_call_operand.vmem [shape: f32[4,3,128], index: 1, kind: input, shape index: {}]
  %s2 = inlined_call_operand.hbm [shape: f32[4,4,128], index: 2, kind: output, shape index: {}]
  %s3 = sld [smem:[#allocation0]]
  $region37: #{tpu_custom_call.1} parent=0
    _
  %s5 = ssub.s32 1, %s3
  %s6 = scalar_select 0, %s5, %s3
  loop: start=0, step=1, limit=3
  $region2: #{tpu_custom_call.1} parent=0 // loop_pre_header
    _
  $region3: #{tpu_custom_call.1} parent=0 // loop_header
    %s8 = sphi 0, %s12
    %p9 = scmp.ge.s32.totalorder %s8, 3
    %s15 = sphi 0, %s15
    %s17 = sphi 0, %s15
    %s25 = sphi 0, %s17
  $region4: #{tpu_custom_call.1} parent=0 // loop_header_branch
    %11 = sbr.rel (%p9) target = $region8
  $region5: #{tpu_custom_call.1} parent=0 // loop_body
    %s13 = ssub.s32 %s8, 1
    %s14 = sadd.s32 %s8, 1
    %s16 = sadd.s32 %s15, 1
    %p18 = scmp.eq.s32.totalorder %s8, 1
    %p19 = scmp.ne.s32.totalorder %s15, %s17
    %p20 = scmp.eq.s32.totalorder %s8, 0
    %p21 = por %p19, %p20
    %p22 = scmp.ne.s32.totalorder %s15, %s17
    %p23 = scmp.eq.s32.totalorder %s13, 1
    %p24 = por %p22, %p23
    %p26 = scmp.ne.s32.totalorder %s17, %s25
    %p27 = scmp.eq.s32.totalorder %s13, 0
    %p28 = por %p26, %p27
    %p29 = scmp.le.s32.totalorder 1, %s8
    // Predicated region
    $region9: #{tpu_custom_call.1} parent=5 // pred_check
      %p30 = pneg %p29
    $region10: #{tpu_custom_call.1} parent=5 // pred_check_branch
      %32 = sbr.rel (%p30) target = $region12
    $region11: #{tpu_custom_call.1} parent=5 // pred_region
      %s33 = ssub.s32 %s8, 1
      // Predicated region
      $region13: #{tpu_custom_call.1} parent=11 // pred_check
        %p34 = pneg %p28
      $region14: #{tpu_custom_call.1} parent=11 // pred_check_branch
        %36 = sbr.rel (%p34) target = $region16
      $region15: #{tpu_custom_call.1} parent=11 // pred_region
        _
      $region16: #{tpu_custom_call.1} parent=11 // pred_fallthru
        _
    $region12: #{tpu_custom_call.1} parent=5 // pred_fallthru
      _
    %p37 = scmp.lt.s32.totalorder %s8, 2
    // Predicated region
    $region17: #{tpu_custom_call.1} parent=5 // pred_check
      %p38 = pneg %p37
    $region18: #{tpu_custom_call.1} parent=5 // pred_check_branch
      %40 = sbr.rel (%p38) target = $region20
    $region19: #{tpu_custom_call.1} parent=5 // pred_region
      _
    $region20: #{tpu_custom_call.1} parent=5 // pred_fallthru
      _
    %p41 = scmp.le.s32.totalorder 1, %s8
    // Predicated region
    $region21: #{tpu_custom_call.1} parent=5 // pred_check
      %p42 = pneg %p41
    $region22: #{tpu_custom_call.1} parent=5 // pred_check_branch
      %44 = sbr.rel (%p42) target = $region24
    $region23: #{tpu_custom_call.1} parent=5 // pred_region
      %s45 = ssub.s32 %s8, 1
      %p46 = pneg %p28
      %p47 = pneg %p24
      %p48 = scmp.lt.s32.totalorder %s13, 0
      %s49 = ssub.s32 0, %s13
      %s50 = scalar_select %p48, %s49, %s13
      %s51 = sand.u32 %s50, 1
      %s52 = ssub.s32 0, %s51
      %s53 = scalar_select %p48, %s52, %s51
      %p54 = scmp.ne.s32.totalorder %s53, 0
      %p55 = scmp.lt.s32.totalorder %s53, 0
      %p56 = pnand %p55, %p54
      %p57 = pneg %p56
      %s58 = sadd.s32 %s53, 2
      %s59 = scalar_select %p57, %s58, %s53
      %p60 = scmp.eq.s32.totalorder %s13, 0
      // Predicated region
      $region25: #{tpu_custom_call.1} parent=23 // pred_check
        %p61 = pneg %p60
      $region26: #{tpu_custom_call.1} parent=23 // pred_check_branch
        %63 = sbr.rel (%p61) target = $region28
      $region27: #{tpu_custom_call.1} parent=23 // pred_region
        %v64 = vld [vmem:[%s0] sm:$0x1]
        %65 = vst [vmem:[#allocation2] sm:$0x1] %v64
        %66 = vst [vmem:[#allocation2 + $0x1] sm:$0x1] %v64
      $region28: #{tpu_custom_call.1} parent=23 // pred_fallthru
        _
      %s67 = smul.u32 %s13, 2
      %s68 = smul.u32 %s67, 4
      %s69 = scalar_lea.vmem %s1, %s68
      %s70 = sadd.s32 1, %s68
      %s71 = scalar_lea.hbm %s2, %s70
      %s72 = scalar_lea.sflag [#allocation3], %s59
      %s73 = sshll.u32 %s69, 4
      %s74 = int_to_ptr.vmem [resolvable:$true] %s73
      %s75 = sshll.u32 %s71, 4
      %s76 = int_to_ptr.hbm [resolvable:$true] %s75
      %80 = dma.vmem_to_hbm [thread:$0]  %s74, 96, %s76, %s72, 64, 64, 3
      %s81 = scalar_lea.hbm %s2, %s68
      %s82 = sadd.s32 %s59, 2
      %s83 = scalar_lea.sflag [#allocation3], %s82
      %s84 = sshll.u32 [#allocation2], 4
      %s85 = int_to_ptr.vmem [resolvable:$true] %s84
      %s86 = sshll.u32 %s81, 4
      %s87 = int_to_ptr.hbm [resolvable:$true] %s86
      %91 = dma.vmem_to_hbm [thread:$0]  %s85, 32, %s87, %s83, 16, 64, 1
      %p92 = scmp.gt.s32.totalorder %s13, 0
      // Predicated region
      $region29: #{tpu_custom_call.1} parent=23 // pred_check
        %p93 = pneg %p92
      $region30: #{tpu_custom_call.1} parent=23 // pred_check_branch
        %95 = sbr.rel (%p93) target = $region32
      $region31: #{tpu_custom_call.1} parent=23 // pred_region
        %s96 = ssub.s32 1, %s59
        %s97 = scalar_lea.sflag [#allocation3], %s96
        %s98 = smul.u32 2, 3
        %s99 = smul.u32 %s98, 1
        %s100 = sshll.u32 %s99, 4
        %101 = dma.done %s97, %s100
        %s102 = sadd.s32 %s96, 2
        %s103 = scalar_lea.sflag [#allocation3], %s102
        %s104 = smul.u32 2, 1
        %s105 = smul.u32 %s104, 1
        %s106 = sshll.u32 %s105, 4
        %107 = dma.done %s103, %s106
      $region32: #{tpu_custom_call.1} parent=23 // pred_fallthru
        _
      %p108 = scmp.eq.s32.totalorder %s13, 1
      // Predicated region
      $region33: #{tpu_custom_call.1} parent=23 // pred_check
        %p109 = pneg %p108
      $region34: #{tpu_custom_call.1} parent=23 // pred_check_branch
        %111 = sbr.rel (%p109) target = $region36
      $region35: #{tpu_custom_call.1} parent=23 // pred_region
        %s112 = smul.u32 2, 3
        %s113 = smul.u32 %s112, 1
        %s114 = sshll.u32 %s113, 4
        %115 = dma.done %s72, %s114
        %s116 = smul.u32 2, 1
        %s117 = smul.u32 %s116, 1
        %s118 = sshll.u32 %s117, 4
        %119 = dma.done %s83, %s118
      $region36: #{tpu_custom_call.1} parent=23 // pred_fallthru
        _
    $region24: #{tpu_custom_call.1} parent=5 // pred_fallthru
      _
  $region6: #{tpu_custom_call.1} parent=0 // loop_footer
    %s12 = sadd.s32 1, %s8
  $region7: #{tpu_custom_call.1} parent=0 // loop_footer_branch
    %7 = sbr.rel target = $region3
  $region8: #{tpu_custom_call.1} parent=0 // loop_exit
    _
  %120 = vsyncmov [#allocation3]
  %s121 = vpop.sfrf %120
  %p122 = scmp.eq.s32.totalorder %s121, 0
  %p123 = pneg %p122
  %125 = shalt.err (%p123)
  %s126 = scalar_lea.sflag [#allocation3], 1
  %127 = vsyncmov %s126
  %s128 = vpop.sfrf %127
  %p129 = scmp.eq.s32.totalorder %s128, 0
  %p130 = pneg %p129
  %132 = shalt.err (%p130)
  %s133 = scalar_lea.sflag [#allocation3], 2
  %134 = vsyncmov %s133
  %s135 = vpop.sfrf %134
  %p136 = scmp.eq.s32.totalorder %s135, 0
  %p137 = pneg %p136
  %139 = shalt.err (%p137)
  %s140 = scalar_lea.sflag [#allocation3], 3
  %141 = vsyncmov %s140
  %s142 = vpop.sfrf %141
  %p143 = scmp.eq.s32.totalorder %s142, 0
  %p144 = pneg %p143
  %146 = shalt.err (%p144)

// kernel: tpu_custom_call.1
$region0: #{tpu_custom_call.1}
  #allocation0 [shape = 'u32[]', space=smem, size = 0x4, offset = 0x4, fixed_abs, tag = 'smem constant byte address 0x4 - core index']
  #allocation1 [shape = 'u32[72,128]{1,0:T(1,128)}', space=vmem, size = 0x9000, scoped, tag = 'internal scratch']
  %s0 = inlined_call_operand.hbm [shape: f32[1,32], index: 0, kind: input, shape index: {}]
  %s1 = inlined_call_operand.hbm [shape: f32[2,256], index: 1, kind: input, shape index: {}]
  %s2 = inlined_call_operand.hbm [shape: f32[2,288], index: 2, kind: output, shape index: {}]
  %s3 = sld [smem:[#allocation0]]
  $region26: #{tpu_custom_call.1} parent=0
    _
  %s5 = ssub.s32 1, %s3
  %s6 = scalar_select 0, %s5, %s3
  $region1: #{tpu_custom_call.1} parent=0
    #allocation2 [shape = 'u8[512]{0}', space=vmem, size = 0x400, scoped, tag = 'input window, operand 0, single buffered']
    #allocation3 [shape = 's32[1]{0}', space=sflag, size = 0x4, scoped, tag = 'scoped memory for tpu_custom_call.1']
    #allocation4 [shape = 's32[1]{0}', space=sflag, size = 0x4, scoped, tag = 'scoped memory for tpu_custom_call.1']
    #allocation5 [shape = 'u8[2048]{0}', space=vmem, size = 0x800, scoped, tag = 'input window, operand 1, single buffered']
    #allocation6 [shape = 's32[1]{0}', space=sflag, size = 0x4, scoped, tag = 'scoped memory for tpu_custom_call.1']
    #allocation7 [shape = 'u8[3072]{0}', space=vmem, size = 0xc00, scoped, tag = 'output window, operand 0, single buffered']
    %7 = vsyncpa [#allocation3], 0
    %8 = vsyncpa [#allocation6], 0
    %9 = vsyncpa [#allocation4], 0
    // Predicated region
    $region2: #{tpu_custom_call.1} parent=1 // pred_check
      _
    $region3: #{tpu_custom_call.1} parent=1 // pred_check_branch
      %11 = sbr.rel (0) target = $region5
    $region4: #{tpu_custom_call.1} parent=1 // pred_region
      %13 = vsyncadd [#allocation3], 0
      %s15 = sshll.u32 %s0, 4
      %s16 = int_to_ptr.hbm [resolvable:$true] %s15
      %s17 = sshll.u32 [#allocation2], 4
      %s18 = int_to_ptr.vmem [resolvable:$true] %s17
      %20 = dma.hbm_to_vmem [thread:$0]  %s16, 16, %s18, [#allocation3]
    $region5: #{tpu_custom_call.1} parent=1 // pred_fallthru
      _
    // Predicated region
    $region6: #{tpu_custom_call.1} parent=1 // pred_check
      _
    $region7: #{tpu_custom_call.1} parent=1 // pred_check_branch
      %22 = sbr.rel (0) target = $region9
    $region8: #{tpu_custom_call.1} parent=1 // pred_region
      %24 = vsyncadd [#allocation6], 0
      %s26 = sshll.u32 %s1, 4
      %s27 = int_to_ptr.hbm [resolvable:$true] %s26
      %s28 = sshll.u32 [#allocation5], 4
      %s29 = int_to_ptr.vmem [resolvable:$true] %s28
      %31 = dma.hbm_to_vmem [thread:$0]  %s27, 64, %s29, [#allocation6]
    $region9: #{tpu_custom_call.1} parent=1 // pred_fallthru
      _
    // Predicated region
    $region10: #{tpu_custom_call.1} parent=1 // pred_check
      _
    $region11: #{tpu_custom_call.1} parent=1 // pred_check_branch
      %33 = sbr.rel (0) target = $region13
    $region12: #{tpu_custom_call.1} parent=1 // pred_region
      %35 = dma.done [#allocation3], 16
    $region13: #{tpu_custom_call.1} parent=1 // pred_fallthru
      _
    // Predicated region
    $region14: #{tpu_custom_call.1} parent=1 // pred_check
      _
    $region15: #{tpu_custom_call.1} parent=1 // pred_check_branch
      %37 = sbr.rel (0) target = $region17
    $region16: #{tpu_custom_call.1} parent=1 // pred_region
      %39 = dma.done [#allocation6], 64
    $region17: #{tpu_custom_call.1} parent=1 // pred_fallthru
      _
    %v40 = vld [vmem:[#allocation2] sm:$0x1]
    %v42 = vperm.slane %v40, 0
    %vm44 = vcmask 254976
    %45 = vst.msk [vmem:[#allocation7] sm:$0x3] %vm44, %v42
    %v46 = vld [vmem:[#allocation5] sm:$0xf]
    %48 = vrot.lane.b32.xlu0 %v46, 32
    %v49 = vpop.permute.xlu0 %48
    %v50 = vrot.slane %v49, 6
    %vm51 = vcmask 261120
    %v52 = vsel %vm51, %v50, %v49
    %vm54 = vcmask 1041664
    %vm55 = vcmask 1043458
    %vm56 = vmor %vm55, %vm54
    %vm57 = vcmask 259076
    %vm58 = vmor %vm57, %vm56
    %59 = vst.msk [vmem:[#allocation7] sm:$0x3f] %vm58, %v52
    // Predicated region
    $region18: #{tpu_custom_call.1} parent=1 // pred_check
      _
    $region19: #{tpu_custom_call.1} parent=1 // pred_check_branch
      %61 = sbr.rel (0) target = $region21
    $region20: #{tpu_custom_call.1} parent=1 // pred_region
      %63 = vsyncadd [#allocation4], 0
      %s65 = sshll.u32 [#allocation7], 4
      %s66 = int_to_ptr.vmem [resolvable:$true] %s65
      %s67 = sshll.u32 %s2, 4
      %s68 = int_to_ptr.hbm [resolvable:$true] %s67
      %70 = dma.vmem_to_hbm [thread:$0]  %s66, 96, %s68, [#allocation4]
    $region21: #{tpu_custom_call.1} parent=1 // pred_fallthru
      _
    // Predicated region
    $region22: #{tpu_custom_call.1} parent=1 // pred_check
      _
    $region23: #{tpu_custom_call.1} parent=1 // pred_check_branch
      %72 = sbr.rel (0) target = $region25
    $region24: #{tpu_custom_call.1} parent=1 // pred_region
      %74 = dma.done [#allocation4], 96
    $region25: #{tpu_custom_call.1} parent=1 // pred_fallthru
      _
    %75 = vsyncpa [#allocation3], 1
    %76 = vsyncpa [#allocation6], 1
    %77 = vsyncpa [#allocation4], 1

</llo_original>
